<compile_context>
chip_gen: v6e
topology: v6e:2x2x1
jax: 0.10.0
libtpu: 0.0.40
codegen_flags: <defaults>
</compile_context>

<pallas_src>
import functools

import jax
import jax.numpy as jnp
from jax import lax
from jax.experimental import pallas as pl
from jax.experimental.pallas import tpu as pltpu


def gine_kernel(src_ref, dst_ref,                       # scalar-prefetch (SMEM) int32 [E_pad]
                x_ref, ea_ref, we_ref, be_ref, cnt_ref,
                w1_ref, b1_ref, w2_ref, b2_ref, wr_ref, br_ref,
                gamma_ref, beta_ref, eps_ref,
                out_ref,
                aggr_ref, ef_ref,
                *, n_edges, tile_e):
    pid = pl.program_id(0)

    # ---- init the scatter-sum accumulator on the first edge tile ------------
    @pl.when(pid == 0)
    def _():
        aggr_ref[...] = jnp.zeros_like(aggr_ref)

    # ---- edge MLP for this tile: Linear(1, Cin) as a VPU broadcast ----------
    # edge_feat[e, :] = edge_attr[e] * W_e + b_e   (no K=1 MXU matmul)
    ef_ref[...] = ea_ref[...] * we_ref[...] + be_ref[...]

    # ---- gather x[src] + scatter-add into aggr over this edge tile ----------
    def edge_body(e, carry):
        g = pid * tile_e + e                                  # global edge id
        valid = (g < n_edges).astype(jnp.float32)             # mask padded edges
        s = src_ref[g]                                        # SMEM scalar reads
        d = dst_ref[g]
        msg = (x_ref[pl.ds(s, 1), :] + ef_ref[pl.ds(e, 1), :]) * valid
        aggr_ref[pl.ds(d, 1), :] = aggr_ref[pl.ds(d, 1), :] + msg
        return carry

    lax.fori_loop(0, tile_e, edge_body, 0)

    # ---- finalize: mean-aggregate + node MLP + residual + BN + ReLU ---------
    @pl.when(pid == pl.num_programs(0) - 1)
    def _():
        f32 = jnp.float32
        x = x_ref[...]                                        # [N, Cin_p]
        inv_cnt = pl.reciprocal(jnp.maximum(cnt_ref[...], 1.0), approx=False)
        aggr = aggr_ref[...] * inv_cnt                        # scatter_mean
        eps = eps_ref[0, 0]
        h = (1.0 + eps) * x + aggr

        # node_mlp: Linear -> ReLU -> Linear
        h1 = jnp.dot(h, w1_ref[...], preferred_element_type=f32) + b1_ref[...]
        h1 = jnp.maximum(h1, 0.0)
        h2 = jnp.dot(h1, w2_ref[...], preferred_element_type=f32) + b2_ref[...]

        # residual projection
        out = h2 + jnp.dot(x, wr_ref[...], preferred_element_type=f32) + br_ref[...]

        # BatchNorm1d over the node (batch) axis, training-mode batch stats.
        # All N rows are resident here; if the node axis were tiled, the stats
        # would have to be accumulated across tiles (two-pass).
        mu = jnp.mean(out, axis=0, keepdims=True)
        var = jnp.mean((out - mu) ** 2, axis=0, keepdims=True)
        out = (out - mu) * lax.rsqrt(var + 1e-5) * gamma_ref[...] + beta_ref[...]

        out = jnp.maximum(out, 0.0)                           # F.relu
        # TODO(synk): dropout(p=0.2) skipped (identity) — torch RNG not reproducible.
        out_ref[...] = out


def _round_up(v, m):
    return ((v + m - 1) // m) * m


def _pad2(a, rows, cols):
    return jnp.pad(a, ((0, rows - a.shape[0]), (0, cols - a.shape[1])))


def gine_layer(x, edge_index, edge_attr, params, *, edge_tile=256):
    """GINELayer forward as one Pallas TPU kernel (grid over edge tiles)."""
    N, Cin = x.shape
    Cout = params["w2"].shape[1]
    E = edge_index.shape[1]
    src = edge_index[0].astype(jnp.int32)
    dst = edge_index[1].astype(jnp.int32)

    # Lane-dense channel padding (multiples of 128): full MXU tiles, unmasked
    # output stores.  Padded columns are exactly zero and sliced off at the end.
    LANE = 128
    Cin_p, Cout_p = _round_up(Cin, LANE), _round_up(Cout, LANE)

    # Edge tiling (sublane-aligned); pad E up to a multiple of the tile.
    tE = max(8, (min(edge_tile, _round_up(E, 8)) // 8) * 8)
    n_tiles = int(pl.cdiv(E, tE))
    E_pad = n_tiles * tE
    pad_e = E_pad - E

    xp = _pad2(x.astype(jnp.float32), N, Cin_p)
    src_p = jnp.pad(src, (0, pad_e))
    dst_p = jnp.pad(dst, (0, pad_e))
    ea_p = jnp.pad(edge_attr.astype(jnp.float32), ((0, pad_e), (0, 0)))

    # Glue: in-degree counts precomputed once (segment-sum), passed as [N, 1].
    counts = jnp.zeros((N, 1), jnp.float32).at[dst].add(1.0)

    we_p = _pad2(params["we"], 1, Cin_p)
    be_p = _pad2(params["be"], 1, Cin_p)
    w1_p = _pad2(params["w1"], Cin_p, Cout_p)
    b1_p = _pad2(params["b1"], 1, Cout_p)
    w2_p = _pad2(params["w2"], Cout_p, Cout_p)
    b2_p = _pad2(params["b2"], 1, Cout_p)
    wr_p = _pad2(params["wr"], Cin_p, Cout_p)
    br_p = _pad2(params["br"], 1, Cout_p)
    gamma_p = _pad2(params["gamma"], 1, Cout_p)
    beta_p = _pad2(params["beta"], 1, Cout_p)

    const = lambda i, s_ref, d_ref: (0, 0)       # resident blocks
    edge_blk = lambda i, s_ref, d_ref: (i, 0)    # tiled over edges

    grid_spec = pltpu.PrefetchScalarGridSpec(
        num_scalar_prefetch=2,                   # src, dst -> SMEM
        grid=(n_tiles,),
        in_specs=[
            pl.BlockSpec((N, Cin_p), const),         # x (resident)
            pl.BlockSpec((tE, 1), edge_blk),         # edge_attr tile
            pl.BlockSpec((1, Cin_p), const),         # we (edge_mlp weight, [1, Cin])
            pl.BlockSpec((1, Cin_p), const),         # be
            pl.BlockSpec((N, 1), const),             # in-degree counts
            pl.BlockSpec((Cin_p, Cout_p), const),    # w1
            pl.BlockSpec((1, Cout_p), const),        # b1
            pl.BlockSpec((Cout_p, Cout_p), const),   # w2
            pl.BlockSpec((1, Cout_p), const),        # b2
            pl.BlockSpec((Cin_p, Cout_p), const),    # wr (residual proj)
            pl.BlockSpec((1, Cout_p), const),        # br
            pl.BlockSpec((1, Cout_p), const),        # gamma (BN weight)
            pl.BlockSpec((1, Cout_p), const),        # beta  (BN bias)
            pl.BlockSpec(memory_space=pltpu.MemorySpace.SMEM),  # eps scalar
        ],
        out_specs=pl.BlockSpec((N, Cout_p), const),
        scratch_shapes=[
            pltpu.VMEM((N, Cin_p), jnp.float32),     # aggr accumulator
            pltpu.VMEM((tE, Cin_p), jnp.float32),    # per-tile edge features
        ],
    )

    out = pl.pallas_call(
        functools.partial(gine_kernel, n_edges=E, tile_e=tE),
        out_shape=jax.ShapeDtypeStruct((N, Cout_p), jnp.float32),
        grid_spec=grid_spec,
        compiler_params=pltpu.CompilerParams(
            # Single grid axis is the edge reduction -> "arbitrary".
            dimension_semantics=("arbitrary",),
            # Explicit VMEM budget (fits v7x's 64 MiB physical / 32 MiB scoped).
            vmem_limit_bytes=32 * 1024 * 1024,
        ),
    )(src_p, dst_p, xp, ea_p, we_p, be_p, counts,
      w1_p, b1_p, w2_p, b2_p, wr_p, br_p, gamma_p, beta_p, params["eps"])

    return out[:, :Cout]


def init_params(key, in_channels, out_channels):
    """Deterministic torch.nn.Linear-style init (uniform +/- 1/sqrt(fan_in))."""
    ks = jax.random.split(key, 8)

    def lin(kw, kb, fan_in, fan_out):
        bound = 1.0 / jnp.sqrt(jnp.float32(fan_in))
        w = jax.random.uniform(kw, (fan_in, fan_out), jnp.float32, -bound, bound)
        b = jax.random.uniform(kb, (1, fan_out), jnp.float32, -bound, bound)
        return w, b

    we, be = lin(ks[0], ks[1], 1, in_channels)                 # edge_mlp
    w1, b1 = lin(ks[2], ks[3], in_channels, out_channels)      # node_mlp[0]
    w2, b2 = lin(ks[4], ks[5], out_channels, out_channels)     # node_mlp[2]
    wr, br = lin(ks[6], ks[7], in_channels, out_channels)      # residual_proj
    return {
        "we": we, "be": be, "w1": w1, "b1": b1, "w2": w2, "b2": b2,
        "wr": wr, "br": br,
        "gamma": jnp.ones((1, out_channels), jnp.float32),     # BN weight
        "beta": jnp.zeros((1, out_channels), jnp.float32),     # BN bias
        "eps": jnp.zeros((1, 1), jnp.float32),                 # GIN eps parameter
    }


def ref_forward(x, edge_index, edge_attr, p):
    """Pure-JAX reference mirroring the torch forward (eval-mode dropout)."""
    src, dst = edge_index[0], edge_index[1]
    N = x.shape[0]
    ef = edge_attr @ p["we"] + p["be"]
    msg = x[src] + ef
    aggr_sum = jnp.zeros((N, x.shape[1]), jnp.float32).at[dst].add(msg)
    counts = jnp.zeros((N,), jnp.float32).at[dst].add(1.0)
    aggr = aggr_sum / jnp.maximum(counts, 1.0)[:, None]
    h = (1.0 + p["eps"][0, 0]) * x + aggr
    h1 = jnp.maximum(h @ p["w1"] + p["b1"], 0.0)
    h2 = h1 @ p["w2"] + p["b2"]
    out = h2 + x @ p["wr"] + p["br"]
    mu = out.mean(axis=0, keepdims=True)
    var = ((out - mu) ** 2).mean(axis=0, keepdims=True)
    out = (out - mu) / jnp.sqrt(var + 1e-5) * p["gamma"] + p["beta"]
    return jnp.maximum(out, 0.0)


if __name__ == "__main__":
    key = jax.random.PRNGKey(0)
    k_x, k_src, k_dst, k_ea, k_p = jax.random.split(key, 5)

    N, E = 8, 16                 # nodes, edges
    in_channels, out_channels = 16, 32

    x = jax.random.normal(k_x, (N, in_channels), jnp.float32)
    src = jax.random.randint(k_src, (E,), 0, N, jnp.int32)
    dst = jax.random.randint(k_dst, (E,), 0, N, jnp.int32)
    edge_index = jnp.stack([src, dst], axis=0)                 # [2, E]
    edge_attr = jax.random.normal(k_ea, (E, 1), jnp.float32)   # [E, 1]

    params = init_params(k_p, in_channels, out_channels)

    # edge_tile=8 -> 2 edge tiles, exercising the cross-tile accumulator path.
    out = gine_layer(x, edge_index, edge_attr, params, edge_tile=8)
    out = jax.block_until_ready(out)

    ref = ref_forward(x, edge_index, edge_attr, params)
    assert out.shape == (N, out_channels)
    assert jnp.allclose(out, ref, rtol=1e-3, atol=1e-3), "mismatch vs JAX reference"

    print("KERNEL_OK")
</pallas_src>

<mosaic_0001>
module attributes {stable_mosaic.version = 11 : i64} {
  func.func @gine_kernel(%arg0: i32, %arg1: memref<16xi32, #tpu.memory_space<smem>>, %arg2: memref<16xi32, #tpu.memory_space<smem>>, %arg3: memref<8x128xf32, #tpu.memory_space<vmem>>, %arg4: memref<8x1xf32, #tpu.memory_space<vmem>>, %arg5: memref<1x128xf32, #tpu.memory_space<vmem>>, %arg6: memref<1x128xf32, #tpu.memory_space<vmem>>, %arg7: memref<8x1xf32, #tpu.memory_space<vmem>>, %arg8: memref<128x128xf32, #tpu.memory_space<vmem>>, %arg9: memref<1x128xf32, #tpu.memory_space<vmem>>, %arg10: memref<128x128xf32, #tpu.memory_space<vmem>>, %arg11: memref<1x128xf32, #tpu.memory_space<vmem>>, %arg12: memref<128x128xf32, #tpu.memory_space<vmem>>, %arg13: memref<1x128xf32, #tpu.memory_space<vmem>>, %arg14: memref<1x128xf32, #tpu.memory_space<vmem>>, %arg15: memref<1x128xf32, #tpu.memory_space<vmem>>, %arg16: memref<1x1xf32, #tpu.memory_space<smem>>, %arg17: memref<8x128xf32, #tpu.memory_space<vmem>>, %arg18: memref<8x128xf32, #tpu.memory_space<vmem>>, %arg19: memref<8x128xf32, #tpu.memory_space<vmem>>) attributes {dimension_semantics = [#tpu.dimension_semantics<arbitrary>], iteration_bounds = array<i64: 2>, scalar_prefetch = 2 : i64, scratch_operands = 2 : i64, tpu.core_type = #tpu.core_type<tc>, window_params = [{pipeline_mode = #tpu.pipeline_mode<synchronous>, transform_indices = @transform_0, window_bounds = array<i64: 8, 128>}, {transform_indices = @transform_1, window_bounds = array<i64: 8, 1>}, {pipeline_mode = #tpu.pipeline_mode<synchronous>, transform_indices = @transform_2, window_bounds = array<i64: 1, 128>}, {pipeline_mode = #tpu.pipeline_mode<synchronous>, transform_indices = @transform_3, window_bounds = array<i64: 1, 128>}, {pipeline_mode = #tpu.pipeline_mode<synchronous>, transform_indices = @transform_4, window_bounds = array<i64: 8, 1>}, {pipeline_mode = #tpu.pipeline_mode<synchronous>, transform_indices = @transform_5, window_bounds = array<i64: 128, 128>}, {pipeline_mode = #tpu.pipeline_mode<synchronous>, transform_indices = @transform_6, window_bounds = array<i64: 1, 128>}, {pipeline_mode = #tpu.pipeline_mode<synchronous>, transform_indices = @transform_7, window_bounds = array<i64: 128, 128>}, {pipeline_mode = #tpu.pipeline_mode<synchronous>, transform_indices = @transform_8, window_bounds = array<i64: 1, 128>}, {pipeline_mode = #tpu.pipeline_mode<synchronous>, transform_indices = @transform_9, window_bounds = array<i64: 128, 128>}, {pipeline_mode = #tpu.pipeline_mode<synchronous>, transform_indices = @transform_10, window_bounds = array<i64: 1, 128>}, {pipeline_mode = #tpu.pipeline_mode<synchronous>, transform_indices = @transform_11, window_bounds = array<i64: 1, 128>}, {pipeline_mode = #tpu.pipeline_mode<synchronous>, transform_indices = @transform_12, window_bounds = array<i64: 1, 128>}, {transform_indices = @transform_13, window_bounds = array<i64: 1, 1>}, {pipeline_mode = #tpu.pipeline_mode<synchronous>, transform_indices = @transform_14, window_bounds = array<i64: 8, 128>}]} {
    %c0_i32 = arith.constant 0 : i32
    %0 = arith.cmpi eq, %arg0, %c0_i32 : i32
    %1 = arith.extui %0 : i1 to i32
    %c0_i32_0 = arith.constant 0 : i32
    %2 = arith.cmpi ne, %1, %c0_i32_0 : i32
    scf.if %2 {
      %cst = arith.constant 0.000000e+00 : f32
      %16 = vector.broadcast %cst : f32 to vector<8x128xf32>
      %c0_12 = arith.constant 0 : index
      %c0_13 = arith.constant 0 : index
      %17 = vector.load %arg18[%c0_12, %c0_13] : memref<8x128xf32, #tpu.memory_space<vmem>>, vector<8x128xf32>
      tpu.vector_store %arg18[%c0_12, %c0_13], %16 {strides = array<i32>} : memref<8x128xf32, #tpu.memory_space<vmem>>, vector<8x128xf32>,
    } else {
    }
    %c0 = arith.constant 0 : index
    %c0_1 = arith.constant 0 : index
    %3 = vector.load %arg4[%c0, %c0_1] : memref<8x1xf32, #tpu.memory_space<vmem>>, vector<8x1xf32>
    %c0_2 = arith.constant 0 : index
    %c0_3 = arith.constant 0 : index
    %4 = vector.load %arg5[%c0_2, %c0_3] : memref<1x128xf32, #tpu.memory_space<vmem>>, vector<1x128xf32>
    %5 = vector.broadcast %3 : vector<8x1xf32> to vector<8x128xf32>
    %6 = vector.broadcast %4 : vector<1x128xf32> to vector<8x128xf32>
    %7 = arith.mulf %5, %6 : vector<8x128xf32>
    %c0_4 = arith.constant 0 : index
    %c0_5 = arith.constant 0 : index
    %8 = vector.load %arg6[%c0_4, %c0_5] : memref<1x128xf32, #tpu.memory_space<vmem>>, vector<1x128xf32>
    %9 = vector.broadcast %8 : vector<1x128xf32> to vector<8x128xf32>
    %10 = arith.addf %7, %9 : vector<8x128xf32>
    %c0_6 = arith.constant 0 : index
    %c0_7 = arith.constant 0 : index
    %11 = vector.load %arg19[%c0_6, %c0_7] : memref<8x128xf32, #tpu.memory_space<vmem>>, vector<8x128xf32>
    tpu.vector_store %arg19[%c0_6, %c0_7], %10 {strides = array<i32>} : memref<8x128xf32, #tpu.memory_space<vmem>>, vector<8x128xf32>,
    %c0_i32_8 = arith.constant 0 : i32
    %c8_i32 = arith.constant 8 : i32
    %12 = arith.addi %c0_i32_8, %c8_i32 : i32
    %c1_i32 = arith.constant 1 : i32
    scf.for %arg20 = %c0_i32_8 to %12 step %c1_i32  : i32 {
      %c8_i32_12 = arith.constant 8 : i32
      %16 = arith.muli %arg0, %c8_i32_12 : i32
      %17 = arith.addi %16, %arg20 : i32
      %c16_i32 = arith.constant 16 : i32
      %18 = arith.cmpi slt, %17, %c16_i32 : i32
      %19 = arith.extui %18 : i1 to i32
      %20 = arith.sitofp %19 : i32 to f32
      %21 = arith.index_cast %17 : i32 to index
      %22 = memref.load %arg1[%21] : memref<16xi32, #tpu.memory_space<smem>>
      %23 = arith.index_cast %17 : i32 to index
      %24 = memref.load %arg2[%23] : memref<16xi32, #tpu.memory_space<smem>>
      %25 = arith.index_cast %22 : i32 to index
      %c0_13 = arith.constant 0 : index
      %26 = vector.load %arg3[%25, %c0_13] : memref<8x128xf32, #tpu.memory_space<vmem>>, vector<1x128xf32>
      %27 = arith.index_cast %arg20 : i32 to index
      %c0_14 = arith.constant 0 : index
      %28 = vector.load %arg19[%27, %c0_14] : memref<8x128xf32, #tpu.memory_space<vmem>>, vector<1x128xf32>
      %29 = arith.addf %26, %28 : vector<1x128xf32>
      %30 = vector.broadcast %20 : f32 to vector<1x128xf32>
      %31 = arith.mulf %29, %30 : vector<1x128xf32>
      %32 = arith.index_cast %24 : i32 to index
      %c0_15 = arith.constant 0 : index
      %33 = vector.load %arg18[%32, %c0_15] : memref<8x128xf32, #tpu.memory_space<vmem>>, vector<1x128xf32>
      %34 = arith.addf %33, %31 : vector<1x128xf32>
      %35 = arith.index_cast %24 : i32 to index
      %c0_16 = arith.constant 0 : index
      %36 = vector.load %arg18[%35, %c0_16] : memref<8x128xf32, #tpu.memory_space<vmem>>, vector<1x128xf32>
      tpu.vector_store %arg18[%35, %c0_16], %34 {strides = array<i32>} : memref<8x128xf32, #tpu.memory_space<vmem>>, vector<1x128xf32>,
    }
    %c8_i32_9 = arith.constant 8 : i32
    %c1_i32_10 = arith.constant 1 : i32
    %13 = arith.cmpi eq, %arg0, %c1_i32_10 : i32
    %14 = arith.extui %13 : i1 to i32
    %c0_i32_11 = arith.constant 0 : i32
    %15 = arith.cmpi ne, %14, %c0_i32_11 : i32
    scf.if %15 {
      %c0_12 = arith.constant 0 : index
      %c0_13 = arith.constant 0 : index
      %16 = vector.load %arg3[%c0_12, %c0_13] : memref<8x128xf32, #tpu.memory_space<vmem>>, vector<8x128xf32>
      %c0_14 = arith.constant 0 : index
      %c0_15 = arith.constant 0 : index
      %17 = vector.load %arg7[%c0_14, %c0_15] : memref<8x1xf32, #tpu.memory_space<vmem>>, vector<8x1xf32>
      %cst = arith.constant 1.000000e+00 : f32
      %18 = vector.broadcast %cst : f32 to vector<8x1xf32>
      %19 = arith.maximumf %17, %18 : vector<8x1xf32>
      %20 = tpu.reciprocal %19 : vector<8x1xf32> -> vector<8x1xf32>
      %c0_16 = arith.constant 0 : index
      %c0_17 = arith.constant 0 : index
      %21 = vector.load %arg18[%c0_16, %c0_17] : memref<8x128xf32, #tpu.memory_space<vmem>>, vector<8x128xf32>
      %22 = vector.broadcast %20 : vector<8x1xf32> to vector<8x128xf32>
      %23 = arith.mulf %21, %22 : vector<8x128xf32>
      %c0_18 = arith.constant 0 : index
      %c0_19 = arith.constant 0 : index
      %24 = memref.load %arg16[%c0_18, %c0_19] : memref<1x1xf32, #tpu.memory_space<smem>>
      %cst_20 = arith.constant 1.000000e+00 : f32
      %25 = arith.addf %cst_20, %24 : f32
      %26 = vector.broadcast %25 : f32 to vector<8x128xf32>
      %27 = arith.mulf %26, %16 : vector<8x128xf32>
      %28 = arith.addf %27, %23 : vector<8x128xf32>
      %c0_21 = arith.constant 0 : index
      %c0_22 = arith.constant 0 : index
      %29 = vector.load %arg8[%c0_21, %c0_22] : memref<128x128xf32, #tpu.memory_space<vmem>>, vector<128x128xf32>
      %cst_23 = arith.constant dense<0.000000e+00> : vector<8x128xf32>
      %30 = tpu.matmul %28, %29, %cst_23 {dimension_numbers = #tpu.dot_dimension_numbers<[1], [0], [0], [1], [0, 0, 1, 1], [], []>} : vector<8x128xf32>, vector<128x128xf32>, vector<8x128xf32> -> vector<8x128xf32>
      %c0_24 = arith.constant 0 : index
      %c0_25 = arith.constant 0 : index
      %31 = vector.load %arg9[%c0_24, %c0_25] : memref<1x128xf32, #tpu.memory_space<vmem>>, vector<1x128xf32>
      %32 = vector.broadcast %31 : vector<1x128xf32> to vector<8x128xf32>
      %33 = arith.addf %30, %32 : vector<8x128xf32>
      %cst_26 = arith.constant 0.000000e+00 : f32
      %34 = vector.broadcast %cst_26 : f32 to vector<8x128xf32>
      %35 = arith.maximumf %33, %34 : vector<8x128xf32>
      %c0_27 = arith.constant 0 : index
      %c0_28 = arith.constant 0 : index
      %36 = vector.load %arg10[%c0_27, %c0_28] : memref<128x128xf32, #tpu.memory_space<vmem>>, vector<128x128xf32>
      %cst_29 = arith.constant dense<0.000000e+00> : vector<8x128xf32>
      %37 = tpu.matmul %35, %36, %cst_29 {dimension_numbers = #tpu.dot_dimension_numbers<[1], [0], [0], [1], [0, 0, 1, 1], [], []>} : vector<8x128xf32>, vector<128x128xf32>, vector<8x128xf32> -> vector<8x128xf32>
      %c0_30 = arith.constant 0 : index
      %c0_31 = arith.constant 0 : index
      %38 = vector.load %arg11[%c0_30, %c0_31] : memref<1x128xf32, #tpu.memory_space<vmem>>, vector<1x128xf32>
      %39 = vector.broadcast %38 : vector<1x128xf32> to vector<8x128xf32>
      %40 = arith.addf %37, %39 : vector<8x128xf32>
      %c0_32 = arith.constant 0 : index
      %c0_33 = arith.constant 0 : index
      %41 = vector.load %arg12[%c0_32, %c0_33] : memref<128x128xf32, #tpu.memory_space<vmem>>, vector<128x128xf32>
      %cst_34 = arith.constant dense<0.000000e+00> : vector<8x128xf32>
      %42 = tpu.matmul %16, %41, %cst_34 {dimension_numbers = #tpu.dot_dimension_numbers<[1], [0], [0], [1], [0, 0, 1, 1], [], []>} : vector<8x128xf32>, vector<128x128xf32>, vector<8x128xf32> -> vector<8x128xf32>
      %43 = arith.addf %40, %42 : vector<8x128xf32>
      %c0_35 = arith.constant 0 : index
      %c0_36 = arith.constant 0 : index
      %44 = vector.load %arg13[%c0_35, %c0_36] : memref<1x128xf32, #tpu.memory_space<vmem>>, vector<1x128xf32>
      %45 = vector.broadcast %44 : vector<1x128xf32> to vector<8x128xf32>
      %46 = arith.addf %43, %45 : vector<8x128xf32>
      %cst_37 = arith.constant dense<0.000000e+00> : vector<128xf32>
      %47 = vector.multi_reduction <add>, %46, %cst_37 [0] : vector<8x128xf32> to vector<128xf32>
      %48 = vector.shape_cast %47 : vector<128xf32> to vector<1x128xf32>
      %cst_38 = arith.constant 8.000000e+00 : f32
      %49 = vector.broadcast %cst_38 : f32 to vector<1x128xf32>
      %50 = arith.divf %48, %49 : vector<1x128xf32>
      %51 = vector.broadcast %50 : vector<1x128xf32> to vector<8x128xf32>
      %52 = arith.subf %46, %51 : vector<8x128xf32>
      %53 = arith.mulf %52, %52 : vector<8x128xf32>
      %cst_39 = arith.constant dense<0.000000e+00> : vector<128xf32>
      %54 = vector.multi_reduction <add>, %53, %cst_39 [0] : vector<8x128xf32> to vector<128xf32>
      %55 = vector.shape_cast %54 : vector<128xf32> to vector<1x128xf32>
      %cst_40 = arith.constant 8.000000e+00 : f32
      %56 = vector.broadcast %cst_40 : f32 to vector<1x128xf32>
      %57 = arith.divf %55, %56 : vector<1x128xf32>
      %58 = vector.broadcast %50 : vector<1x128xf32> to vector<8x128xf32>
      %59 = arith.subf %46, %58 : vector<8x128xf32>
      %cst_41 = arith.constant 9.99999974E-6 : f32
      %60 = vector.broadcast %cst_41 : f32 to vector<1x128xf32>
      %61 = arith.addf %57, %60 : vector<1x128xf32>
      %62 = math.rsqrt %61 : vector<1x128xf32>
      %63 = vector.broadcast %62 : vector<1x128xf32> to vector<8x128xf32>
      %64 = arith.mulf %59, %63 : vector<8x128xf32>
      %c0_42 = arith.constant 0 : index
      %c0_43 = arith.constant 0 : index
      %65 = vector.load %arg14[%c0_42, %c0_43] : memref<1x128xf32, #tpu.memory_space<vmem>>, vector<1x128xf32>
      %66 = vector.broadcast %65 : vector<1x128xf32> to vector<8x128xf32>
      %67 = arith.mulf %64, %66 : vector<8x128xf32>
      %c0_44 = arith.constant 0 : index
      %c0_45 = arith.constant 0 : index
      %68 = vector.load %arg15[%c0_44, %c0_45] : memref<1x128xf32, #tpu.memory_space<vmem>>, vector<1x128xf32>
      %69 = vector.broadcast %68 : vector<1x128xf32> to vector<8x128xf32>
      %70 = arith.addf %67, %69 : vector<8x128xf32>
      %cst_46 = arith.constant 0.000000e+00 : f32
      %71 = vector.broadcast %cst_46 : f32 to vector<8x128xf32>
      %72 = arith.maximumf %70, %71 : vector<8x128xf32>
      %c0_47 = arith.constant 0 : index
      %c0_48 = arith.constant 0 : index
      %73 = vector.load %arg17[%c0_47, %c0_48] : memref<8x128xf32, #tpu.memory_space<vmem>>, vector<8x128xf32>
      tpu.vector_store %arg17[%c0_47, %c0_48], %72 {strides = array<i32>} : memref<8x128xf32, #tpu.memory_space<vmem>>, vector<8x128xf32>,
    } else {
    }
    return
  }
  func.func @transform_0(%arg0: i32, %arg1: memref<16xi32, #tpu.memory_space<smem>>, %arg2: memref<16xi32, #tpu.memory_space<smem>>) -> (i32, i32) {
    %c0_i32 = arith.constant 0 : i32
    %c0_i32_0 = arith.constant 0 : i32
    %c0_i32_1 = arith.constant 0 : i32
    return %c0_i32, %c0_i32_0 : i32, i32
  }
  func.func @transform_1(%arg0: i32, %arg1: memref<16xi32, #tpu.memory_space<smem>>, %arg2: memref<16xi32, #tpu.memory_space<smem>>) -> (i32, i32) {
    %c0_i32 = arith.constant 0 : i32
    %c0_i32_0 = arith.constant 0 : i32
    return %arg0, %c0_i32 : i32, i32
  }
  func.func @transform_2(%arg0: i32, %arg1: memref<16xi32, #tpu.memory_space<smem>>, %arg2: memref<16xi32, #tpu.memory_space<smem>>) -> (i32, i32) {
    %c0_i32 = arith.constant 0 : i32
    %c0_i32_0 = arith.constant 0 : i32
    %c0_i32_1 = arith.constant 0 : i32
    return %c0_i32, %c0_i32_0 : i32, i32
  }
  func.func @transform_3(%arg0: i32, %arg1: memref<16xi32, #tpu.memory_space<smem>>, %arg2: memref<16xi32, #tpu.memory_space<smem>>) -> (i32, i32) {
    %c0_i32 = arith.constant 0 : i32
    %c0_i32_0 = arith.constant 0 : i32
    %c0_i32_1 = arith.constant 0 : i32
    return %c0_i32, %c0_i32_0 : i32, i32
  }
  func.func @transform_4(%arg0: i32, %arg1: memref<16xi32, #tpu.memory_space<smem>>, %arg2: memref<16xi32, #tpu.memory_space<smem>>) -> (i32, i32) {
    %c0_i32 = arith.constant 0 : i32
    %c0_i32_0 = arith.constant 0 : i32
    %c0_i32_1 = arith.constant 0 : i32
    return %c0_i32, %c0_i32_0 : i32, i32
  }
  func.func @transform_5(%arg0: i32, %arg1: memref<16xi32, #tpu.memory_space<smem>>, %arg2: memref<16xi32, #tpu.memory_space<smem>>) -> (i32, i32) {
    %c0_i32 = arith.constant 0 : i32
    %c0_i32_0 = arith.constant 0 : i32
    %c0_i32_1 = arith.constant 0 : i32
    return %c0_i32, %c0_i32_0 : i32, i32
  }
  func.func @transform_6(%arg0: i32, %arg1: memref<16xi32, #tpu.memory_space<smem>>, %arg2: memref<16xi32, #tpu.memory_space<smem>>) -> (i32, i32) {
    %c0_i32 = arith.constant 0 : i32
    %c0_i32_0 = arith.constant 0 : i32
    %c0_i32_1 = arith.constant 0 : i32
    return %c0_i32, %c0_i32_0 : i32, i32
  }
  func.func @transform_7(%arg0: i32, %arg1: memref<16xi32, #tpu.memory_space<smem>>, %arg2: memref<16xi32, #tpu.memory_space<smem>>) -> (i32, i32) {
    %c0_i32 = arith.constant 0 : i32
    %c0_i32_0 = arith.constant 0 : i32
    %c0_i32_1 = arith.constant 0 : i32
    return %c0_i32, %c0_i32_0 : i32, i32
  }
  func.func @transform_8(%arg0: i32, %arg1: memref<16xi32, #tpu.memory_space<smem>>, %arg2: memref<16xi32, #tpu.memory_space<smem>>) -> (i32, i32) {
    %c0_i32 = arith.constant 0 : i32
    %c0_i32_0 = arith.constant 0 : i32
    %c0_i32_1 = arith.constant 0 : i32
    return %c0_i32, %c0_i32_0 : i32, i32
  }
  func.func @transform_9(%arg0: i32, %arg1: memref<16xi32, #tpu.memory_space<smem>>, %arg2: memref<16xi32, #tpu.memory_space<smem>>) -> (i32, i32) {
    %c0_i32 = arith.constant 0 : i32
    %c0_i32_0 = arith.constant 0 : i32
    %c0_i32_1 = arith.constant 0 : i32
    return %c0_i32, %c0_i32_0 : i32, i32
  }
  func.func @transform_10(%arg0: i32, %arg1: memref<16xi32, #tpu.memory_space<smem>>, %arg2: memref<16xi32, #tpu.memory_space<smem>>) -> (i32, i32) {
    %c0_i32 = arith.constant 0 : i32
    %c0_i32_0 = arith.constant 0 : i32
    %c0_i32_1 = arith.constant 0 : i32
    return %c0_i32, %c0_i32_0 : i32, i32
  }
  func.func @transform_11(%arg0: i32, %arg1: memref<16xi32, #tpu.memory_space<smem>>, %arg2: memref<16xi32, #tpu.memory_space<smem>>) -> (i32, i32) {
    %c0_i32 = arith.constant 0 : i32
    %c0_i32_0 = arith.constant 0 : i32
    %c0_i32_1 = arith.constant 0 : i32
    return %c0_i32, %c0_i32_0 : i32, i32
  }
  func.func @transform_12(%arg0: i32, %arg1: memref<16xi32, #tpu.memory_space<smem>>, %arg2: memref<16xi32, #tpu.memory_space<smem>>) -> (i32, i32) {
    %c0_i32 = arith.constant 0 : i32
    %c0_i32_0 = arith.constant 0 : i32
    %c0_i32_1 = arith.constant 0 : i32
    return %c0_i32, %c0_i32_0 : i32, i32
  }
  func.func @transform_13(%arg0: i32, %arg1: memref<16xi32, #tpu.memory_space<smem>>, %arg2: memref<16xi32, #tpu.memory_space<smem>>) -> (i32, i32) {
    %c0_i32 = arith.constant 0 : i32
    %c0_i32_0 = arith.constant 0 : i32
    %c0_i32_1 = arith.constant 0 : i32
    return %c0_i32, %c0_i32_0 : i32, i32
  }
  func.func @transform_14(%arg0: i32, %arg1: memref<16xi32, #tpu.memory_space<smem>>, %arg2: memref<16xi32, #tpu.memory_space<smem>>) -> (i32, i32) {
    %c0_i32 = arith.constant 0 : i32
    %c0_i32_0 = arith.constant 0 : i32
    %c0_i32_1 = arith.constant 0 : i32
    return %c0_i32, %c0_i32_0 : i32, i32
  }
}

</mosaic_0001>

<llo_original>
// kernel: tpu_custom_call.1
$region0: #{tpu_custom_call.1}
  #allocation0 [shape = 'u32[]', space=smem, size = 0x4, offset = 0x4, fixed_abs, tag = 'smem constant byte address 0x4 - core index']
  #allocation1 [shape = 'u32[144,128]{1,0:T(1,128)}', space=vmem, size = 0x12000, scoped, tag = 'internal scratch']
  #allocation2 [shape = 'f32[8,128]{1,0:T(8,128)}', space=vmem, size = 0x1000, scoped, tag = 'scratch operand']
  #allocation3 [shape = 'f32[8,128]{1,0:T(8,128)}', space=vmem, size = 0x1000, scoped, tag = 'scratch operand']
  #allocation4 [shape = 's32[1]{0}', space=sflag, size = 0x4, scoped, tag = 'scoped memory for tpu_custom_call.1']
  #allocation5 [shape = 'u8[512]{0}', space=smem, size = 0x200, scoped, tag = 'prefetched SMEM operand 0']
  #allocation6 [shape = 'u8[512]{0}', space=smem, size = 0x200, scoped, tag = 'prefetched SMEM operand 1']
  #allocation7 [shape = 'f32[1,1]{1,0:T(1,128)S(6)}', space=smem, size = 0x200, scoped, tag = 'scoped memory for tpu_custom_call.1']
  %s0 = inlined_call_operand.vmem [shape: s32[16], index: 0, kind: input, shape index: {}]
  %s1 = inlined_call_operand.vmem [shape: s32[16], index: 1, kind: input, shape index: {}]
  %s2 = inlined_call_operand.vmem [shape: f32[8,128], index: 2, kind: input, shape index: {}]
  %s3 = inlined_call_operand.vmem [shape: f32[16,1], index: 3, kind: input, shape index: {}]
  %s4 = inlined_call_operand.vmem [shape: f32[1,128], index: 4, kind: input, shape index: {}]
  %s5 = inlined_call_operand.vmem [shape: f32[1,128], index: 5, kind: input, shape index: {}]
  %s6 = inlined_call_operand.vmem [shape: f32[8,1], index: 6, kind: input, shape index: {}]
  %s7 = inlined_call_operand.hbm [shape: f32[128,128], index: 7, kind: input, shape index: {}]
  %s8 = inlined_call_operand.vmem [shape: f32[1,128], index: 8, kind: input, shape index: {}]
  %s9 = inlined_call_operand.hbm [shape: f32[128,128], index: 9, kind: input, shape index: {}]
  %s10 = inlined_call_operand.vmem [shape: f32[1,128], index: 10, kind: input, shape index: {}]
  %s11 = inlined_call_operand.hbm [shape: f32[128,128], index: 11, kind: input, shape index: {}]
  %s12 = inlined_call_operand.vmem [shape: f32[1,128], index: 12, kind: input, shape index: {}]
  %s13 = inlined_call_operand.vmem [shape: f32[1,128], index: 13, kind: input, shape index: {}]
  %s14 = inlined_call_operand.vmem [shape: f32[1,128], index: 14, kind: input, shape index: {}]
  %s15 = inlined_call_operand.<no memory space> [shape: f32[1,1], index: 15, kind: input, shape index: {}]
  %s16 = inlined_call_operand.hbm [shape: f32[8,128], index: 16, kind: output, shape index: {}]
  %s17 = sld [smem:[#allocation0]]
  $region116: #{tpu_custom_call.1} parent=0
    _
  %s19 = ssub.s32 1, %s17
  %s20 = scalar_select 0, %s19, %s17
  %s21 = sshll.u32 %s0, 4
  %s22 = int_to_ptr.vmem [resolvable:$true] %s21
  %24 = dma.vmem_to_smem %s22, 16, [#allocation5], [#allocation4]
  %s25 = sshll.u32 %s1, 4
  %s26 = int_to_ptr.vmem [resolvable:$true] %s25
  %28 = dma.vmem_to_smem %s26, 16, [#allocation6], [#allocation4]
  %29 = sst [smem:[#allocation7]] %s15
  %30 = dma.done [#allocation4], 32
  %31 = sfence
  $region1: #{tpu_custom_call.1} parent=0
    #allocation8 [shape = 'u8[65536]{0}', space=vmem, size = 0x10000, scoped, tag = 'input window, operand 7, single buffered']
    #allocation9 [shape = 's32[2]{0}', space=sflag, size = 0x8, scoped, tag = 'scoped memory for tpu_custom_call.1']
    #allocation10 [shape = 's32[2]{0}', space=sflag, size = 0x8, scoped, tag = 'scoped memory for tpu_custom_call.1']
    #allocation11 [shape = 'u8[65536]{0}', space=vmem, size = 0x10000, scoped, tag = 'input window, operand 9, single buffered']
    #allocation12 [shape = 's32[1]{0}', space=sflag, size = 0x4, scoped, tag = 'scoped memory for tpu_custom_call.1']
    #allocation13 [shape = 'u8[65536]{0}', space=vmem, size = 0x10000, scoped, tag = 'input window, operand 11, single buffered']
    #allocation14 [shape = 'u8[4096]{0}', space=vmem, size = 0x1000, scoped, tag = 'output window, operand 0, single buffered']
    %32 = vsyncpa [#allocation9], 0
    %33 = vsyncpa [#allocation12], 0
    %34 = vsyncpa [#allocation10], 0
    loop: start=0, step=1, limit=4
    $region2: #{tpu_custom_call.1} parent=1 // loop_pre_header
      _
    $region3: #{tpu_custom_call.1} parent=1 // loop_header
      %s36 = sphi 0, %s40
      %p37 = scmp.ge.s32.totalorder %s36, 4
      %s44 = sphi 0, %s44
      %s46 = sphi 0, %s44
      %s47 = sphi 0, %s46
      %s61 = sphi 0, %s47
      %s67 = sphi 0, %s69
      %s70 = sphi 0, %s67
      %s71 = sphi 0, %s70
      %s87 = sphi 0, %s71
      %s91 = sphi 0, %s91
      %s93 = sphi 0, %s91
      %s94 = sphi 0, %s93
      %s108 = sphi 0, %s94
      %s112 = sphi 0, %s112
      %s114 = sphi 0, %s112
      %s115 = sphi 0, %s114
      %s129 = sphi 0, %s115
      %s133 = sphi 0, %s133
      %s135 = sphi 0, %s133
      %s136 = sphi 0, %s135
      %s150 = sphi 0, %s136
      %s154 = sphi 0, %s154
      %s156 = sphi 0, %s154
      %s157 = sphi 0, %s156
      %s171 = sphi 0, %s157
      %s175 = sphi 0, %s175
      %s177 = sphi 0, %s175
      %s178 = sphi 0, %s177
      %s192 = sphi 0, %s178
      %s196 = sphi 0, %s196
      %s198 = sphi 0, %s196
      %s199 = sphi 0, %s198
      %s213 = sphi 0, %s199
      %s217 = sphi 0, %s217
      %s219 = sphi 0, %s217
      %s220 = sphi 0, %s219
      %s234 = sphi 0, %s220
      %s238 = sphi 0, %s238
      %s240 = sphi 0, %s238
      %s241 = sphi 0, %s240
      %s255 = sphi 0, %s241
      %s259 = sphi 0, %s259
      %s261 = sphi 0, %s259
      %s262 = sphi 0, %s261
      %s276 = sphi 0, %s262
      %s280 = sphi 0, %s280
      %s282 = sphi 0, %s280
      %s283 = sphi 0, %s282
      %s297 = sphi 0, %s283
      %s301 = sphi 0, %s301
      %s303 = sphi 0, %s301
      %s304 = sphi 0, %s303
      %s318 = sphi 0, %s304
      %s322 = sphi 0, %s322
      %s324 = sphi 0, %s322
      %s325 = sphi 0, %s324
      %s339 = sphi 0, %s325
      %s343 = sphi 0, %s343
      %s345 = sphi 0, %s343
      %s346 = sphi 0, %s345
      %s360 = sphi 0, %s346
    $region4: #{tpu_custom_call.1} parent=1 // loop_header_branch
      %39 = sbr.rel (%p37) target = $region8
    $region5: #{tpu_custom_call.1} parent=1 // loop_body
      %s41 = ssub.s32 %s36, 1
      %s42 = ssub.s32 %s36, 2
      %s43 = sadd.s32 %s36, 1
      %s45 = sadd.s32 %s44, 1
      %p48 = scmp.eq.s32.totalorder %s36, 1
      %p49 = scmp.ne.s32.totalorder %s44, %s46
      %p50 = scmp.eq.s32.totalorder %s36, 0
      %p51 = por %p49, %p50
      %p52 = scmp.ne.s32.totalorder %s44, %s46
      %p53 = scmp.eq.s32.totalorder %s41, 1
      %p54 = por %p52, %p53
      %p55 = scmp.ne.s32.totalorder %s46, %s47
      %p56 = scmp.eq.s32.totalorder %s41, 0
      %p57 = por %p55, %p56
      %p58 = scmp.ne.s32.totalorder %s46, %s47
      %p59 = scmp.eq.s32.totalorder %s42, 1
      %p60 = por %p58, %p59
      %p62 = scmp.ne.s32.totalorder %s47, %s61
      %p63 = scmp.eq.s32.totalorder %s42, 0
      %p64 = por %p62, %p63
      %s65 = ssub.s32 %s36, %s43
      %p66 = scmp.eq.s32.totalorder %s65, 0
      %s68 = sadd.s32 %s67, 1
      %s69 = scalar_select %p66, %s67, %s68
      %p72 = pneg %p66
      %p73 = scmp.eq.s32.totalorder %s36, 1
      %p74 = por %p72, %p73
      %p75 = scmp.ne.s32.totalorder %s67, %s70
      %p76 = scmp.eq.s32.totalorder %s36, 0
      %p77 = por %p75, %p76
      %p78 = scmp.ne.s32.totalorder %s67, %s70
      %p79 = scmp.eq.s32.totalorder %s41, 1
      %p80 = por %p78, %p79
      %p81 = scmp.ne.s32.totalorder %s70, %s71
      %p82 = scmp.eq.s32.totalorder %s41, 0
      %p83 = por %p81, %p82
      %p84 = scmp.ne.s32.totalorder %s70, %s71
      %p85 = scmp.eq.s32.totalorder %s42, 1
      %p86 = por %p84, %p85
      %p88 = scmp.ne.s32.totalorder %s71, %s87
      %p89 = scmp.eq.s32.totalorder %s42, 0
      %p90 = por %p88, %p89
      %s92 = sadd.s32 %s91, 1
      %p95 = scmp.eq.s32.totalorder %s36, 1
      %p96 = scmp.ne.s32.totalorder %s91, %s93
      %p97 = scmp.eq.s32.totalorder %s36, 0
      %p98 = por %p96, %p97
      %p99 = scmp.ne.s32.totalorder %s91, %s93
      %p100 = scmp.eq.s32.totalorder %s41, 1
      %p101 = por %p99, %p100
      %p102 = scmp.ne.s32.totalorder %s93, %s94
      %p103 = scmp.eq.s32.totalorder %s41, 0
      %p104 = por %p102, %p103
      %p105 = scmp.ne.s32.totalorder %s93, %s94
      %p106 = scmp.eq.s32.totalorder %s42, 1
      %p107 = por %p105, %p106
      %p109 = scmp.ne.s32.totalorder %s94, %s108
      %p110 = scmp.eq.s32.totalorder %s42, 0
      %p111 = por %p109, %p110
      %s113 = sadd.s32 %s112, 1
      %p116 = scmp.eq.s32.totalorder %s36, 1
      %p117 = scmp.ne.s32.totalorder %s112, %s114
      %p118 = scmp.eq.s32.totalorder %s36, 0
      %p119 = por %p117, %p118
      %p120 = scmp.ne.s32.totalorder %s112, %s114
      %p121 = scmp.eq.s32.totalorder %s41, 1
      %p122 = por %p120, %p121
      %p123 = scmp.ne.s32.totalorder %s114, %s115
      %p124 = scmp.eq.s32.totalorder %s41, 0
      %p125 = por %p123, %p124
      %p126 = scmp.ne.s32.totalorder %s114, %s115
      %p127 = scmp.eq.s32.totalorder %s42, 1
      %p128 = por %p126, %p127
      %p130 = scmp.ne.s32.totalorder %s115, %s129
      %p131 = scmp.eq.s32.totalorder %s42, 0
      %p132 = por %p130, %p131
      %s134 = sadd.s32 %s133, 1
      %p137 = scmp.eq.s32.totalorder %s36, 1
      %p138 = scmp.ne.s32.totalorder %s133, %s135
      %p139 = scmp.eq.s32.totalorder %s36, 0
      %p140 = por %p138, %p139
      %p141 = scmp.ne.s32.totalorder %s133, %s135
      %p142 = scmp.eq.s32.totalorder %s41, 1
      %p143 = por %p141, %p142
      %p144 = scmp.ne.s32.totalorder %s135, %s136
      %p145 = scmp.eq.s32.totalorder %s41, 0
      %p146 = por %p144, %p145
      %p147 = scmp.ne.s32.totalorder %s135, %s136
      %p148 = scmp.eq.s32.totalorder %s42, 1
      %p149 = por %p147, %p148
      %p151 = scmp.ne.s32.totalorder %s136, %s150
      %p152 = scmp.eq.s32.totalorder %s42, 0
      %p153 = por %p151, %p152
      %s155 = sadd.s32 %s154, 1
      %p158 = scmp.eq.s32.totalorder %s36, 1
      %p159 = scmp.ne.s32.totalorder %s154, %s156
      %p160 = scmp.eq.s32.totalorder %s36, 0
      %p161 = por %p159, %p160
      %p162 = scmp.ne.s32.totalorder %s154, %s156
      %p163 = scmp.eq.s32.totalorder %s41, 1
      %p164 = por %p162, %p163
      %p165 = scmp.ne.s32.totalorder %s156, %s157
      %p166 = scmp.eq.s32.totalorder %s41, 0
      %p167 = por %p165, %p166
      %p168 = scmp.ne.s32.totalorder %s156, %s157
      %p169 = scmp.eq.s32.totalorder %s42, 1
      %p170 = por %p168, %p169
      %p172 = scmp.ne.s32.totalorder %s157, %s171
      %p173 = scmp.eq.s32.totalorder %s42, 0
      %p174 = por %p172, %p173
      %s176 = sadd.s32 %s175, 1
      %p179 = scmp.eq.s32.totalorder %s36, 1
      %p180 = scmp.ne.s32.totalorder %s175, %s177
      %p181 = scmp.eq.s32.totalorder %s36, 0
      %p182 = por %p180, %p181
      %p183 = scmp.ne.s32.totalorder %s175, %s177
      %p184 = scmp.eq.s32.totalorder %s41, 1
      %p185 = por %p183, %p184
      %p186 = scmp.ne.s32.totalorder %s177, %s178
      %p187 = scmp.eq.s32.totalorder %s41, 0
      %p188 = por %p186, %p187
      %p189 = scmp.ne.s32.totalorder %s177, %s178
      %p190 = scmp.eq.s32.totalorder %s42, 1
      %p191 = por %p189, %p190
      %p193 = scmp.ne.s32.totalorder %s178, %s192
      %p194 = scmp.eq.s32.totalorder %s42, 0
      %p195 = por %p193, %p194
      %s197 = sadd.s32 %s196, 1
      %p200 = scmp.eq.s32.totalorder %s36, 1
      %p201 = scmp.ne.s32.totalorder %s196, %s198
      %p202 = scmp.eq.s32.totalorder %s36, 0
      %p203 = por %p201, %p202
      %p204 = scmp.ne.s32.totalorder %s196, %s198
      %p205 = scmp.eq.s32.totalorder %s41, 1
      %p206 = por %p204, %p205
      %p207 = scmp.ne.s32.totalorder %s198, %s199
      %p208 = scmp.eq.s32.totalorder %s41, 0
      %p209 = por %p207, %p208
      %p210 = scmp.ne.s32.totalorder %s198, %s199
      %p211 = scmp.eq.s32.totalorder %s42, 1
      %p212 = por %p210, %p211
      %p214 = scmp.ne.s32.totalorder %s199, %s213
      %p215 = scmp.eq.s32.totalorder %s42, 0
      %p216 = por %p214, %p215
      %s218 = sadd.s32 %s217, 1
      %p221 = scmp.eq.s32.totalorder %s36, 1
      %p222 = scmp.ne.s32.totalorder %s217, %s219
      %p223 = scmp.eq.s32.totalorder %s36, 0
      %p224 = por %p222, %p223
      %p225 = scmp.ne.s32.totalorder %s217, %s219
      %p226 = scmp.eq.s32.totalorder %s41, 1
      %p227 = por %p225, %p226
      %p228 = scmp.ne.s32.totalorder %s219, %s220
      %p229 = scmp.eq.s32.totalorder %s41, 0
      %p230 = por %p228, %p229
      %p231 = scmp.ne.s32.totalorder %s219, %s220
      %p232 = scmp.eq.s32.totalorder %s42, 1
      %p233 = por %p231, %p232
      %p235 = scmp.ne.s32.totalorder %s220, %s234
      %p236 = scmp.eq.s32.totalorder %s42, 0
      %p237 = por %p235, %p236
      %s239 = sadd.s32 %s238, 1
      %p242 = scmp.eq.s32.totalorder %s36, 1
      %p243 = scmp.ne.s32.totalorder %s238, %s240
      %p244 = scmp.eq.s32.totalorder %s36, 0
      %p245 = por %p243, %p244
      %p246 = scmp.ne.s32.totalorder %s238, %s240
      %p247 = scmp.eq.s32.totalorder %s41, 1
      %p248 = por %p246, %p247
      %p249 = scmp.ne.s32.totalorder %s240, %s241
      %p250 = scmp.eq.s32.totalorder %s41, 0
      %p251 = por %p249, %p250
      %p252 = scmp.ne.s32.totalorder %s240, %s241
      %p253 = scmp.eq.s32.totalorder %s42, 1
      %p254 = por %p252, %p253
      %p256 = scmp.ne.s32.totalorder %s241, %s255
      %p257 = scmp.eq.s32.totalorder %s42, 0
      %p258 = por %p256, %p257
      %s260 = sadd.s32 %s259, 1
      %p263 = scmp.eq.s32.totalorder %s36, 1
      %p264 = scmp.ne.s32.totalorder %s259, %s261
      %p265 = scmp.eq.s32.totalorder %s36, 0
      %p266 = por %p264, %p265
      %p267 = scmp.ne.s32.totalorder %s259, %s261
      %p268 = scmp.eq.s32.totalorder %s41, 1
      %p269 = por %p267, %p268
      %p270 = scmp.ne.s32.totalorder %s261, %s262
      %p271 = scmp.eq.s32.totalorder %s41, 0
      %p272 = por %p270, %p271
      %p273 = scmp.ne.s32.totalorder %s261, %s262
      %p274 = scmp.eq.s32.totalorder %s42, 1
      %p275 = por %p273, %p274
      %p277 = scmp.ne.s32.totalorder %s262, %s276
      %p278 = scmp.eq.s32.totalorder %s42, 0
      %p279 = por %p277, %p278
      %s281 = sadd.s32 %s280, 1
      %p284 = scmp.eq.s32.totalorder %s36, 1
      %p285 = scmp.ne.s32.totalorder %s280, %s282
      %p286 = scmp.eq.s32.totalorder %s36, 0
      %p287 = por %p285, %p286
      %p288 = scmp.ne.s32.totalorder %s280, %s282
      %p289 = scmp.eq.s32.totalorder %s41, 1
      %p290 = por %p288, %p289
      %p291 = scmp.ne.s32.totalorder %s282, %s283
      %p292 = scmp.eq.s32.totalorder %s41, 0
      %p293 = por %p291, %p292
      %p294 = scmp.ne.s32.totalorder %s282, %s283
      %p295 = scmp.eq.s32.totalorder %s42, 1
      %p296 = por %p294, %p295
      %p298 = scmp.ne.s32.totalorder %s283, %s297
      %p299 = scmp.eq.s32.totalorder %s42, 0
      %p300 = por %p298, %p299
      %s302 = sadd.s32 %s301, 1
      %p305 = scmp.eq.s32.totalorder %s36, 1
      %p306 = scmp.ne.s32.totalorder %s301, %s303
      %p307 = scmp.eq.s32.totalorder %s36, 0
      %p308 = por %p306, %p307
      %p309 = scmp.ne.s32.totalorder %s301, %s303
      %p310 = scmp.eq.s32.totalorder %s41, 1
      %p311 = por %p309, %p310
      %p312 = scmp.ne.s32.totalorder %s303, %s304
      %p313 = scmp.eq.s32.totalorder %s41, 0
      %p314 = por %p312, %p313
      %p315 = scmp.ne.s32.totalorder %s303, %s304
      %p316 = scmp.eq.s32.totalorder %s42, 1
      %p317 = por %p315, %p316
      %p319 = scmp.ne.s32.totalorder %s304, %s318
      %p320 = scmp.eq.s32.totalorder %s42, 0
      %p321 = por %p319, %p320
      %s323 = sadd.s32 %s322, 1
      %p326 = scmp.eq.s32.totalorder %s36, 1
      %p327 = scmp.ne.s32.totalorder %s322, %s324
      %p328 = scmp.eq.s32.totalorder %s36, 0
      %p329 = por %p327, %p328
      %p330 = scmp.ne.s32.totalorder %s322, %s324
      %p331 = scmp.eq.s32.totalorder %s41, 1
      %p332 = por %p330, %p331
      %p333 = scmp.ne.s32.totalorder %s324, %s325
      %p334 = scmp.eq.s32.totalorder %s41, 0
      %p335 = por %p333, %p334
      %p336 = scmp.ne.s32.totalorder %s324, %s325
      %p337 = scmp.eq.s32.totalorder %s42, 1
      %p338 = por %p336, %p337
      %p340 = scmp.ne.s32.totalorder %s325, %s339
      %p341 = scmp.eq.s32.totalorder %s42, 0
      %p342 = por %p340, %p341
      %s344 = sadd.s32 %s343, 1
      %p347 = scmp.eq.s32.totalorder %s36, 1
      %p348 = scmp.ne.s32.totalorder %s343, %s345
      %p349 = scmp.eq.s32.totalorder %s36, 0
      %p350 = por %p348, %p349
      %p351 = scmp.ne.s32.totalorder %s343, %s345
      %p352 = scmp.eq.s32.totalorder %s41, 1
      %p353 = por %p351, %p352
      %p354 = scmp.ne.s32.totalorder %s345, %s346
      %p355 = scmp.eq.s32.totalorder %s41, 0
      %p356 = por %p354, %p355
      %p357 = scmp.ne.s32.totalorder %s345, %s346
      %p358 = scmp.eq.s32.totalorder %s42, 1
      %p359 = por %p357, %p358
      %p361 = scmp.ne.s32.totalorder %s346, %s360
      %p362 = scmp.eq.s32.totalorder %s42, 0
      %p363 = por %p361, %p362
      %p364 = scmp.le.s32.totalorder 1, %s36
      %p365 = scmp.lt.s32.totalorder %s36, 3
      %p366 = pnand %p364, %p365
      %p367 = pneg %p366
      // Predicated region
      $region9: #{tpu_custom_call.1} parent=5 // pred_check
        _
      $region10: #{tpu_custom_call.1} parent=5 // pred_check_branch
        %369 = sbr.rel (%p366) target = $region12
      $region11: #{tpu_custom_call.1} parent=5 // pred_region
        %s370 = ssub.s32 %s36, 1
        // Predicated region
        $region13: #{tpu_custom_call.1} parent=11 // pred_check
          %p371 = pneg %p57
        $region14: #{tpu_custom_call.1} parent=11 // pred_check_branch
          %373 = sbr.rel (%p371) target = $region16
        $region15: #{tpu_custom_call.1} parent=11 // pred_region
          _
        $region16: #{tpu_custom_call.1} parent=11 // pred_fallthru
          _
        // Predicated region
        $region17: #{tpu_custom_call.1} parent=11 // pred_check
          %p374 = pneg %p104
        $region18: #{tpu_custom_call.1} parent=11 // pred_check_branch
          %376 = sbr.rel (%p374) target = $region20
        $region19: #{tpu_custom_call.1} parent=11 // pred_region
          _
        $region20: #{tpu_custom_call.1} parent=11 // pred_fallthru
          _
        // Predicated region
        $region21: #{tpu_custom_call.1} parent=11 // pred_check
          %p377 = pneg %p125
        $region22: #{tpu_custom_call.1} parent=11 // pred_check_branch
          %379 = sbr.rel (%p377) target = $region24
        $region23: #{tpu_custom_call.1} parent=11 // pred_region
          _
        $region24: #{tpu_custom_call.1} parent=11 // pred_fallthru
          _
        // Predicated region
        $region25: #{tpu_custom_call.1} parent=11 // pred_check
          %p380 = pneg %p146
        $region26: #{tpu_custom_call.1} parent=11 // pred_check_branch
          %382 = sbr.rel (%p380) target = $region28
        $region27: #{tpu_custom_call.1} parent=11 // pred_region
          _
        $region28: #{tpu_custom_call.1} parent=11 // pred_fallthru
          _
        // Predicated region
        $region29: #{tpu_custom_call.1} parent=11 // pred_check
          %p383 = pneg %p167
        $region30: #{tpu_custom_call.1} parent=11 // pred_check_branch
          %385 = sbr.rel (%p383) target = $region32
        $region31: #{tpu_custom_call.1} parent=11 // pred_region
          %s387 = ssub.s32 2048, 2048
          %388 = vsyncadd [#allocation9], %s387
          %s389 = sshll.u32 [#allocation8], 4
          %s390 = int_to_ptr.vmem [resolvable:$true] %s389
          %395 = dma.hbm_to_vmem [thread:$0]  %s7, 2048, %s390, [#allocation9], 128, 128, 8
        $region32: #{tpu_custom_call.1} parent=11 // pred_fallthru
          _
        // Predicated region
        $region33: #{tpu_custom_call.1} parent=11 // pred_check
          %p396 = pneg %p188
        $region34: #{tpu_custom_call.1} parent=11 // pred_check_branch
          %398 = sbr.rel (%p396) target = $region36
        $region35: #{tpu_custom_call.1} parent=11 // pred_region
          _
        $region36: #{tpu_custom_call.1} parent=11 // pred_fallthru
          _
        // Predicated region
        $region37: #{tpu_custom_call.1} parent=11 // pred_check
          %p399 = pneg %p209
        $region38: #{tpu_custom_call.1} parent=11 // pred_check_branch
          %401 = sbr.rel (%p399) target = $region40
        $region39: #{tpu_custom_call.1} parent=11 // pred_region
          %s403 = ssub.s32 2048, 2048
          %404 = vsyncadd [#allocation12], %s403
          %s405 = sshll.u32 [#allocation11], 4
          %s406 = int_to_ptr.vmem [resolvable:$true] %s405
          %411 = dma.hbm_to_vmem [thread:$0]  %s9, 2048, %s406, [#allocation12], 128, 128, 8
        $region40: #{tpu_custom_call.1} parent=11 // pred_fallthru
          _
        // Predicated region
        $region41: #{tpu_custom_call.1} parent=11 // pred_check
          %p412 = pneg %p230
        $region42: #{tpu_custom_call.1} parent=11 // pred_check_branch
          %414 = sbr.rel (%p412) target = $region44
        $region43: #{tpu_custom_call.1} parent=11 // pred_region
          _
        $region44: #{tpu_custom_call.1} parent=11 // pred_fallthru
          _
        // Predicated region
        $region45: #{tpu_custom_call.1} parent=11 // pred_check
          %p415 = pneg %p251
        $region46: #{tpu_custom_call.1} parent=11 // pred_check_branch
          %417 = sbr.rel (%p415) target = $region48
        $region47: #{tpu_custom_call.1} parent=11 // pred_region
          %s419 = ssub.s32 2048, 2048
          %420 = vsyncadd [#allocation12], %s419
          %s421 = sshll.u32 [#allocation13], 4
          %s422 = int_to_ptr.vmem [resolvable:$true] %s421
          %427 = dma.hbm_to_vmem [thread:$0]  %s11, 2048, %s422, [#allocation12], 128, 128, 8
        $region48: #{tpu_custom_call.1} parent=11 // pred_fallthru
          _
        // Predicated region
        $region49: #{tpu_custom_call.1} parent=11 // pred_check
          %p428 = pneg %p272
        $region50: #{tpu_custom_call.1} parent=11 // pred_check_branch
          %430 = sbr.rel (%p428) target = $region52
        $region51: #{tpu_custom_call.1} parent=11 // pred_region
          _
        $region52: #{tpu_custom_call.1} parent=11 // pred_fallthru
          _
        // Predicated region
        $region53: #{tpu_custom_call.1} parent=11 // pred_check
          %p431 = pneg %p293
        $region54: #{tpu_custom_call.1} parent=11 // pred_check_branch
          %433 = sbr.rel (%p431) target = $region56
        $region55: #{tpu_custom_call.1} parent=11 // pred_region
          _
        $region56: #{tpu_custom_call.1} parent=11 // pred_fallthru
          _
        // Predicated region
        $region57: #{tpu_custom_call.1} parent=11 // pred_check
          %p434 = pneg %p314
        $region58: #{tpu_custom_call.1} parent=11 // pred_check_branch
          %436 = sbr.rel (%p434) target = $region60
        $region59: #{tpu_custom_call.1} parent=11 // pred_region
          _
        $region60: #{tpu_custom_call.1} parent=11 // pred_fallthru
          _
        // Predicated region
        $region61: #{tpu_custom_call.1} parent=11 // pred_check
          %p437 = pneg %p335
        $region62: #{tpu_custom_call.1} parent=11 // pred_check_branch
          %439 = sbr.rel (%p437) target = $region64
        $region63: #{tpu_custom_call.1} parent=11 // pred_region
          _
        $region64: #{tpu_custom_call.1} parent=11 // pred_fallthru
          _
      $region12: #{tpu_custom_call.1} parent=5 // pred_fallthru
        _
      %p440 = scmp.lt.s32.totalorder %s36, 2
      // Predicated region
      $region65: #{tpu_custom_call.1} parent=5 // pred_check
        %p441 = pneg %p440
      $region66: #{tpu_custom_call.1} parent=5 // pred_check_branch
        %443 = sbr.rel (%p441) target = $region68
      $region67: #{tpu_custom_call.1} parent=5 // pred_region
        // Predicated region
        $region69: #{tpu_custom_call.1} parent=67 // pred_check
          %p444 = pneg %p77
        $region70: #{tpu_custom_call.1} parent=67 // pred_check_branch
          %446 = sbr.rel (%p444) target = $region72
        $region71: #{tpu_custom_call.1} parent=67 // pred_region
          %p447 = scmp.lt.s32.totalorder %s36, 1
          %s448 = scalar_select %p447, %s36, 1
          %s449 = smul.addr %s448, 8
          %s450 = scalar_lea.vmem %s3, %s449
        $region72: #{tpu_custom_call.1} parent=67 // pred_fallthru
          _
      $region68: #{tpu_custom_call.1} parent=5 // pred_fallthru
        _
      %p451 = scmp.le.s32.totalorder 1, %s36
      %p452 = scmp.lt.s32.totalorder %s36, 3
      %p453 = pnand %p451, %p452
      %p454 = pneg %p453
      // Predicated region
      $region73: #{tpu_custom_call.1} parent=5 // pred_check
        _
      $region74: #{tpu_custom_call.1} parent=5 // pred_check_branch
        %456 = sbr.rel (%p453) target = $region76
      $region75: #{tpu_custom_call.1} parent=5 // pred_region
        %s457 = ssub.s32 %s36, 1
        // Predicated region
        $region77: #{tpu_custom_call.1} parent=75 // pred_check
          %p458 = pneg %p167
        $region78: #{tpu_custom_call.1} parent=75 // pred_check_branch
          %460 = sbr.rel (%p458) target = $region80
        $region79: #{tpu_custom_call.1} parent=75 // pred_region
          %461 = dma.done [#allocation9], 2048
        $region80: #{tpu_custom_call.1} parent=75 // pred_fallthru
          _
        // Predicated region
        $region81: #{tpu_custom_call.1} parent=75 // pred_check
          %p462 = pneg %p209
        $region82: #{tpu_custom_call.1} parent=75 // pred_check_branch
          %464 = sbr.rel (%p462) target = $region84
        $region83: #{tpu_custom_call.1} parent=75 // pred_region
          %465 = dma.done [#allocation12], 2048
        $region84: #{tpu_custom_call.1} parent=75 // pred_fallthru
          _
        // Predicated region
        $region85: #{tpu_custom_call.1} parent=75 // pred_check
          %p466 = pneg %p251
        $region86: #{tpu_custom_call.1} parent=75 // pred_check_branch
          %468 = sbr.rel (%p466) target = $region88
        $region87: #{tpu_custom_call.1} parent=75 // pred_region
          %469 = dma.done [#allocation12], 2048
        $region88: #{tpu_custom_call.1} parent=75 // pred_fallthru
          _
        %p470 = pneg %p57
        %p471 = pneg %p54
        %p472 = scmp.lt.s32.totalorder %s41, 1
        %s473 = scalar_select %p472, %s41, 1
        %s474 = smul.addr %s473, 8
        %s475 = scalar_lea.vmem %s3, %s474
        %p476 = pneg %p83
        %p477 = pneg %p80
        %p478 = pneg %p104
        %p479 = pneg %p101
        %p480 = pneg %p125
        %p481 = pneg %p122
        %p482 = pneg %p146
        %p483 = pneg %p143
        %p484 = pneg %p167
        %p485 = pneg %p164
        %p486 = pneg %p188
        %p487 = pneg %p185
        %p488 = pneg %p209
        %p489 = pneg %p206
        %p490 = pneg %p230
        %p491 = pneg %p227
        %p492 = pneg %p251
        %p493 = pneg %p248
        %p494 = pneg %p272
        %p495 = pneg %p269
        %p496 = pneg %p293
        %p497 = pneg %p290
        %p498 = pneg %p314
        %p499 = pneg %p311
        %p500 = pneg %p335
        %p501 = pneg %p332
        %p502 = pneg %p356
        %p503 = pneg %p353
        %p504 = scmp.lt.s32.totalorder %s41, 1
        %s505 = scalar_select %p504, %s41, 1
        %s506 = smul.addr %s505, 8
        %s507 = scalar_lea.vmem %s3, %s506
        %p508 = scmp.eq.s32.totalorder %s41, 0
        // Predicated region
        $region89: #{tpu_custom_call.1} parent=75 // pred_check
          %p509 = pneg %p508
        $region90: #{tpu_custom_call.1} parent=75 // pred_check_branch
          %511 = sbr.rel (%p509) target = $region92
        $region91: #{tpu_custom_call.1} parent=75 // pred_region
          %512 = vst [vmem:[#allocation2] sm:$0xff] 0.0
        $region92: #{tpu_custom_call.1} parent=75 // pred_fallthru
          _
        %v513 = vld [vmem:[%s507] sm:$0xff]
        %v514 = vld [vmem:[%s4] sm:$0x1]
        %516 = vset.pattern.permute.xlu0 0
        %517 = vperm.xlu0 %516, %v513
        %v518 = vpop.permute.xlu0 %517
        %v521 = vlaneseq
        %v522 = vshrl.u32 %v521, 7
        %v523 = vsub.s32 0, %v522
        %v524 = vrot.slane %v514, %v523
        %v526 = vmul.f32 %v518, %v524
        %v527 = vld [vmem:[%s5] sm:$0x1]
        %v529 = vlaneseq
        %v530 = vshrl.u32 %v529, 7
        %v531 = vsub.s32 0, %v530
        %v532 = vrot.slane %v527, %v531
        %v534 = vadd.f32 %v526, %v532
        %535 = vst [vmem:[#allocation3] sm:$0xff] %v534
        loop: start=0, step=1, limit=8
        $region93: #{tpu_custom_call.1} parent=75 // loop_pre_header
          _
        $region94: #{tpu_custom_call.1} parent=75 // loop_header
          %s537 = sphi 0, %s541
          %p538 = scmp.ge.s32.totalorder %s537, 8
        $region95: #{tpu_custom_call.1} parent=75 // loop_header_branch
          %540 = sbr.rel (%p538) target = $region99
        $region96: #{tpu_custom_call.1} parent=75 // loop_body
          %s542 = smul.u32 %s41, 8
          %s543 = sadd.s32 %s542, %s537
          %p544 = scmp.lt.s32.totalorder %s543, 16
          %s545 = scalar_select %p544, 1, 0
          %s546 = scvt.s32.f32 %s545
          %s547 = sld [smem:[#allocation5 + %s543]]
          %s548 = sld [smem:[#allocation6 + %s543]]
          %s549 = scalar_lea.vmem %s2, %s547
          %v550 = vld [vmem:[%s549] sm:$0x1]
          %s551 = scalar_lea.vmem [#allocation3], %s537
          %v552 = vld [vmem:[%s551] sm:$0x1]
          %v553 = vadd.f32 %v550, %v552
          %v554 = vstv %s546
          %v555 = vmul.f32 %v553, %v554
          %s556 = scalar_lea.vmem [#allocation2], %s548
          %v557 = vld [vmem:[%s556] sm:$0x1]
          %v558 = vadd.f32 %v557, %v555
          %559 = vst [vmem:[%s556] sm:$0x1] %v558
        $region97: #{tpu_custom_call.1} parent=75 // loop_footer
          %s541 = sadd.s32 1, %s537
        $region98: #{tpu_custom_call.1} parent=75 // loop_footer_branch
          %536 = sbr.rel target = $region94
        $region99: #{tpu_custom_call.1} parent=75 // loop_exit
          _
        %p560 = scmp.eq.s32.totalorder %s41, 1
        // Predicated region
        $region100: #{tpu_custom_call.1} parent=75 // pred_check
          %p561 = pneg %p560
        $region101: #{tpu_custom_call.1} parent=75 // pred_check_branch
          %563 = sbr.rel (%p561) target = $region103
        $region102: #{tpu_custom_call.1} parent=75 // pred_region
          %v564 = vld [vmem:[%s2] sm:$0xff]
          %v565 = vld [vmem:[%s6] sm:$0xff]
          %v566 = vmax.f32 %v565, 1.0
          %v567 = vrcp.pop %v566
          %v568 = vld [vmem:[#allocation2] sm:$0xff]
          %570 = vset.pattern.permute.xlu0 0
          %571 = vperm.xlu0 %570, %v567
          %v572 = vpop.permute.xlu0 %571
          %v574 = vmul.f32 %v568, %v572
          %s575 = sld [smem:[#allocation7]]
          %s576 = sadd.f32 %s575, 1.0
          %v577 = vstv %s576
          %v578 = vmul.f32 %v577, %v564
          %v579 = vadd.f32 %v578, %v574
          %v580 = vld [vmem:[#allocation8] sm:$0xff]
          %v581 = vld [vmem:[#allocation8 + $0x8] sm:$0xff]
          %v582 = vld [vmem:[#allocation8 + $0x10] sm:$0xff]
          %v583 = vld [vmem:[#allocation8 + $0x18] sm:$0xff]
          %v584 = vld [vmem:[#allocation8 + $0x20] sm:$0xff]
          %v585 = vld [vmem:[#allocation8 + $0x28] sm:$0xff]
          %v586 = vld [vmem:[#allocation8 + $0x30] sm:$0xff]
          %v587 = vld [vmem:[#allocation8 + $0x38] sm:$0xff]
          %v588 = vld [vmem:[#allocation8 + $0x40] sm:$0xff]
          %v589 = vld [vmem:[#allocation8 + $0x48] sm:$0xff]
          %v590 = vld [vmem:[#allocation8 + $0x50] sm:$0xff]
          %v591 = vld [vmem:[#allocation8 + $0x58] sm:$0xff]
          %v592 = vld [vmem:[#allocation8 + $0x60] sm:$0xff]
          %v593 = vld [vmem:[#allocation8 + $0x68] sm:$0xff]
          %v594 = vld [vmem:[#allocation8 + $0x70] sm:$0xff]
          %v595 = vld [vmem:[#allocation8 + $0x78] sm:$0xff]
          %v596 = vld [vmem:[%s8] sm:$0x1]
          %v598 = vlaneseq
          %v599 = vshrl.u32 %v598, 7
          %v600 = vsub.s32 0, %v599
          %v601 = vrot.slane %v596, %v600
          %603 = vmatprep.subr.mxu0 0.0
          %604 = vmatpush1.msra.mxu0 %v595
          %605 = vmatprep.subr.mxu0 0.0
          %606 = vmatpush1.msra.mxu0 %v594
          %607 = vmatprep.subr.mxu0 0.0
          %608 = vmatpush1.msra.mxu0 %v593
          %609 = vmatprep.subr.mxu0 0.0
          %610 = vmatpush1.msra.mxu0 %v592
          %611 = vmatprep.subr.mxu0 0.0
          %612 = vmatpush1.msra.mxu0 %v591
          %613 = vmatprep.subr.mxu0 0.0
          %614 = vmatpush1.msra.mxu0 %v590
          %615 = vmatprep.subr.mxu0 0.0
          %616 = vmatpush1.msra.mxu0 %v589
          %617 = vmatprep.subr.mxu0 0.0
          %618 = vmatpush1.msra.mxu0 %v588
          %619 = vmatprep.subr.mxu0 0.0
          %620 = vmatpush1.msra.mxu0 %v587
          %621 = vmatprep.subr.mxu0 0.0
          %622 = vmatpush1.msra.mxu0 %v586
          %623 = vmatprep.subr.mxu0 0.0
          %624 = vmatpush1.msra.mxu0 %v585
          %625 = vmatprep.subr.mxu0 0.0
          %626 = vmatpush1.msra.mxu0 %v584
          %627 = vmatprep.subr.mxu0 0.0
          %628 = vmatpush1.msra.mxu0 %v583
          %629 = vmatprep.subr.mxu0 0.0
          %630 = vmatpush1.msra.mxu0 %v582
          %631 = vmatprep.subr.mxu0 0.0
          %632 = vmatpush1.msra.mxu0 %v581
          %633 = vmatprep.subr.mxu0 0.0
          %634 = vmatpush1.msra.mxu0 %v580
          %635 = vmatprep.subr.mxu0 0.0
          %636 = vmatpush2.msra.mxu0 0.0
          %637 = vmatprep.subr.mxu0 0.0
          %638 = vmatpush2.msra.mxu0 0.0
          %639 = vmatprep.subr.mxu0 0.0
          %640 = vmatpush2.msra.mxu0 0.0
          %641 = vmatprep.subr.mxu0 0.0
          %642 = vmatpush2.msra.mxu0 0.0
          %643 = vmatprep.subr.mxu0 0.0
          %644 = vmatpush2.msra.mxu0 0.0
          %645 = vmatprep.subr.mxu0 0.0
          %646 = vmatpush2.msra.mxu0 0.0
          %647 = vmatprep.subr.mxu0 0.0
          %648 = vmatpush2.msra.mxu0 0.0
          %649 = vmatprep.subr.mxu0 0.0
          %650 = vmatpush2.msra.mxu0 0.0
          %651 = vmatprep.subr.mxu0 0.0
          %652 = vmatpush2.msra.mxu0 0.0
          %653 = vmatprep.subr.mxu0 0.0
          %654 = vmatpush2.msra.mxu0 0.0
          %655 = vmatprep.subr.mxu0 0.0
          %656 = vmatpush2.msra.mxu0 0.0
          %657 = vmatprep.subr.mxu0 0.0
          %658 = vmatpush2.msra.mxu0 0.0
          %659 = vmatprep.subr.mxu0 0.0
          %660 = vmatpush2.msra.mxu0 0.0
          %661 = vmatprep.subr.mxu0 0.0
          %662 = vmatpush2.msra.mxu0 0.0
          %663 = vmatprep.subr.mxu0 0.0
          %664 = vmatpush2.msra.mxu0 0.0
          %665 = vmatprep.subr.mxu0 0.0
          %666 = vmatpush2.msra.mxu0 0.0
          %667 = vmatprep.mubr.f32.mxu0 0.0
          %668 = vmatmul.mubr.f32.gmra.mxu0 %v579
          %v669 = vpop.f32.mrf.mxu0
          %v670 = vadd.f32 %v601, %v669
          %v671 = vpop.f32.mrf.mxu0
          %672 = vdwg.mxu0
          %v673 = vmax.f32 %v670, 0.0
          %v674 = vld [vmem:[#allocation11] sm:$0xff]
          %v675 = vld [vmem:[#allocation11 + $0x8] sm:$0xff]
          %v676 = vld [vmem:[#allocation11 + $0x10] sm:$0xff]
          %v677 = vld [vmem:[#allocation11 + $0x18] sm:$0xff]
          %v678 = vld [vmem:[#allocation11 + $0x20] sm:$0xff]
          %v679 = vld [vmem:[#allocation11 + $0x28] sm:$0xff]
          %v680 = vld [vmem:[#allocation11 + $0x30] sm:$0xff]
          %v681 = vld [vmem:[#allocation11 + $0x38] sm:$0xff]
          %v682 = vld [vmem:[#allocation11 + $0x40] sm:$0xff]
          %v683 = vld [vmem:[#allocation11 + $0x48] sm:$0xff]
          %v684 = vld [vmem:[#allocation11 + $0x50] sm:$0xff]
          %v685 = vld [vmem:[#allocation11 + $0x58] sm:$0xff]
          %v686 = vld [vmem:[#allocation11 + $0x60] sm:$0xff]
          %v687 = vld [vmem:[#allocation11 + $0x68] sm:$0xff]
          %v688 = vld [vmem:[#allocation11 + $0x70] sm:$0xff]
          %v689 = vld [vmem:[#allocation11 + $0x78] sm:$0xff]
          %v690 = vld [vmem:[%s10] sm:$0x1]
          %v692 = vlaneseq
          %v693 = vshrl.u32 %v692, 7
          %v694 = vsub.s32 0, %v693
          %v695 = vrot.slane %v690, %v694
          %697 = vmatprep.subr.mxu0 0.0
          %698 = vmatpush1.msra.mxu0 %v689
          %699 = vmatprep.subr.mxu0 0.0
          %700 = vmatpush1.msra.mxu0 %v688
          %701 = vmatprep.subr.mxu0 0.0
          %702 = vmatpush1.msra.mxu0 %v687
          %703 = vmatprep.subr.mxu0 0.0
          %704 = vmatpush1.msra.mxu0 %v686
          %705 = vmatprep.subr.mxu0 0.0
          %706 = vmatpush1.msra.mxu0 %v685
          %707 = vmatprep.subr.mxu0 0.0
          %708 = vmatpush1.msra.mxu0 %v684
          %709 = vmatprep.subr.mxu0 0.0
          %710 = vmatpush1.msra.mxu0 %v683
          %711 = vmatprep.subr.mxu0 0.0
          %712 = vmatpush1.msra.mxu0 %v682
          %713 = vmatprep.subr.mxu0 0.0
          %714 = vmatpush1.msra.mxu0 %v681
          %715 = vmatprep.subr.mxu0 0.0
          %716 = vmatpush1.msra.mxu0 %v680
          %717 = vmatprep.subr.mxu0 0.0
          %718 = vmatpush1.msra.mxu0 %v679
          %719 = vmatprep.subr.mxu0 0.0
          %720 = vmatpush1.msra.mxu0 %v678
          %721 = vmatprep.subr.mxu0 0.0
          %722 = vmatpush1.msra.mxu0 %v677
          %723 = vmatprep.subr.mxu0 0.0
          %724 = vmatpush1.msra.mxu0 %v676
          %725 = vmatprep.subr.mxu0 0.0
          %726 = vmatpush1.msra.mxu0 %v675
          %727 = vmatprep.subr.mxu0 0.0
          %728 = vmatpush1.msra.mxu0 %v674
          %729 = vmatprep.subr.mxu0 0.0
          %730 = vmatpush2.msra.mxu0 0.0
          %731 = vmatprep.subr.mxu0 0.0
          %732 = vmatpush2.msra.mxu0 0.0
          %733 = vmatprep.subr.mxu0 0.0
          %734 = vmatpush2.msra.mxu0 0.0
          %735 = vmatprep.subr.mxu0 0.0
          %736 = vmatpush2.msra.mxu0 0.0
          %737 = vmatprep.subr.mxu0 0.0
          %738 = vmatpush2.msra.mxu0 0.0
          %739 = vmatprep.subr.mxu0 0.0
          %740 = vmatpush2.msra.mxu0 0.0
          %741 = vmatprep.subr.mxu0 0.0
          %742 = vmatpush2.msra.mxu0 0.0
          %743 = vmatprep.subr.mxu0 0.0
          %744 = vmatpush2.msra.mxu0 0.0
          %745 = vmatprep.subr.mxu0 0.0
          %746 = vmatpush2.msra.mxu0 0.0
          %747 = vmatprep.subr.mxu0 0.0
          %748 = vmatpush2.msra.mxu0 0.0
          %749 = vmatprep.subr.mxu0 0.0
          %750 = vmatpush2.msra.mxu0 0.0
          %751 = vmatprep.subr.mxu0 0.0
          %752 = vmatpush2.msra.mxu0 0.0
          %753 = vmatprep.subr.mxu0 0.0
          %754 = vmatpush2.msra.mxu0 0.0
          %755 = vmatprep.subr.mxu0 0.0
          %756 = vmatpush2.msra.mxu0 0.0
          %757 = vmatprep.subr.mxu0 0.0
          %758 = vmatpush2.msra.mxu0 0.0
          %759 = vmatprep.subr.mxu0 0.0
          %760 = vmatpush2.msra.mxu0 0.0
          %761 = vmatprep.mubr.f32.mxu0 0.0
          %762 = vmatmul.mubr.f32.gmra.mxu0 %v673
          %v763 = vpop.f32.mrf.mxu0
          %v764 = vadd.f32 %v695, %v763
          %v765 = vpop.f32.mrf.mxu0
          %766 = vdwg.mxu0
          %v767 = vld [vmem:[#allocation13] sm:$0xff]
          %v768 = vld [vmem:[#allocation13 + $0x8] sm:$0xff]
          %v769 = vld [vmem:[#allocation13 + $0x10] sm:$0xff]
          %v770 = vld [vmem:[#allocation13 + $0x18] sm:$0xff]
          %v771 = vld [vmem:[#allocation13 + $0x20] sm:$0xff]
          %v772 = vld [vmem:[#allocation13 + $0x28] sm:$0xff]
          %v773 = vld [vmem:[#allocation13 + $0x30] sm:$0xff]
          %v774 = vld [vmem:[#allocation13 + $0x38] sm:$0xff]
          %v775 = vld [vmem:[#allocation13 + $0x40] sm:$0xff]
          %v776 = vld [vmem:[#allocation13 + $0x48] sm:$0xff]
          %v777 = vld [vmem:[#allocation13 + $0x50] sm:$0xff]
          %v778 = vld [vmem:[#allocation13 + $0x58] sm:$0xff]
          %v779 = vld [vmem:[#allocation13 + $0x60] sm:$0xff]
          %v780 = vld [vmem:[#allocation13 + $0x68] sm:$0xff]
          %v781 = vld [vmem:[#allocation13 + $0x70] sm:$0xff]
          %v782 = vld [vmem:[#allocation13 + $0x78] sm:$0xff]
          %783 = vmatprep.subr.mxu0 0.0
          %784 = vmatpush1.msra.mxu0 %v782
          %785 = vmatprep.subr.mxu0 0.0
          %786 = vmatpush1.msra.mxu0 %v781
          %787 = vmatprep.subr.mxu0 0.0
          %788 = vmatpush1.msra.mxu0 %v780
          %789 = vmatprep.subr.mxu0 0.0
          %790 = vmatpush1.msra.mxu0 %v779
          %791 = vmatprep.subr.mxu0 0.0
          %792 = vmatpush1.msra.mxu0 %v778
          %793 = vmatprep.subr.mxu0 0.0
          %794 = vmatpush1.msra.mxu0 %v777
          %795 = vmatprep.subr.mxu0 0.0
          %796 = vmatpush1.msra.mxu0 %v776
          %797 = vmatprep.subr.mxu0 0.0
          %798 = vmatpush1.msra.mxu0 %v775
          %799 = vmatprep.subr.mxu0 0.0
          %800 = vmatpush1.msra.mxu0 %v774
          %801 = vmatprep.subr.mxu0 0.0
          %802 = vmatpush1.msra.mxu0 %v773
          %803 = vmatprep.subr.mxu0 0.0
          %804 = vmatpush1.msra.mxu0 %v772
          %805 = vmatprep.subr.mxu0 0.0
          %806 = vmatpush1.msra.mxu0 %v771
          %807 = vmatprep.subr.mxu0 0.0
          %808 = vmatpush1.msra.mxu0 %v770
          %809 = vmatprep.subr.mxu0 0.0
          %810 = vmatpush1.msra.mxu0 %v769
          %811 = vmatprep.subr.mxu0 0.0
          %812 = vmatpush1.msra.mxu0 %v768
          %813 = vmatprep.subr.mxu0 0.0
          %814 = vmatpush1.msra.mxu0 %v767
          %815 = vmatprep.subr.mxu0 0.0
          %816 = vmatpush2.msra.mxu0 0.0
          %817 = vmatprep.subr.mxu0 0.0
          %818 = vmatpush2.msra.mxu0 0.0
          %819 = vmatprep.subr.mxu0 0.0
          %820 = vmatpush2.msra.mxu0 0.0
          %821 = vmatprep.subr.mxu0 0.0
          %822 = vmatpush2.msra.mxu0 0.0
          %823 = vmatprep.subr.mxu0 0.0
          %824 = vmatpush2.msra.mxu0 0.0
          %825 = vmatprep.subr.mxu0 0.0
          %826 = vmatpush2.msra.mxu0 0.0
          %827 = vmatprep.subr.mxu0 0.0
          %828 = vmatpush2.msra.mxu0 0.0
          %829 = vmatprep.subr.mxu0 0.0
          %830 = vmatpush2.msra.mxu0 0.0
          %831 = vmatprep.subr.mxu0 0.0
          %832 = vmatpush2.msra.mxu0 0.0
          %833 = vmatprep.subr.mxu0 0.0
          %834 = vmatpush2.msra.mxu0 0.0
          %835 = vmatprep.subr.mxu0 0.0
          %836 = vmatpush2.msra.mxu0 0.0
          %837 = vmatprep.subr.mxu0 0.0
          %838 = vmatpush2.msra.mxu0 0.0
          %839 = vmatprep.subr.mxu0 0.0
          %840 = vmatpush2.msra.mxu0 0.0
          %841 = vmatprep.subr.mxu0 0.0
          %842 = vmatpush2.msra.mxu0 0.0
          %843 = vmatprep.subr.mxu0 0.0
          %844 = vmatpush2.msra.mxu0 0.0
          %845 = vmatprep.subr.mxu0 0.0
          %846 = vmatpush2.msra.mxu0 0.0
          %847 = vmatprep.mubr.f32.mxu0 0.0
          %848 = vmatmul.mubr.f32.gmra.mxu0 %v564
          %v849 = vpop.f32.mrf.mxu0
          %v850 = vadd.f32 0.0, %v849
          %v851 = vpop.f32.mrf.mxu0
          %852 = vdwg.mxu0
          %v853 = vadd.f32 %v764, %v850
          %v854 = vld [vmem:[%s12] sm:$0x1]
          %v856 = vlaneseq
          %v857 = vshrl.u32 %v856, 7
          %v858 = vsub.s32 0, %v857
          %v859 = vrot.slane %v854, %v858
          %v861 = vadd.f32 %v853, %v859
          %v862 = vrot.slane %v861, 4
          %v863 = vadd.f32 %v861, %v862
          %v864 = vrot.slane %v863, 2
          %v865 = vadd.f32 %v863, %v864
          %v866 = vrot.slane %v865, 1
          %v867 = vadd.f32 %v865, %v866
          %v868 = vrcp.pop 8.0
          %v869 = vmul.f32 %v867, %v868
          %v870 = vsub.f32 %v861, %v869
          %v871 = vmul.f32 %v870, %v870
          %v872 = vrot.slane %v871, 4
          %v873 = vadd.f32 %v871, %v872
          %v874 = vrot.slane %v873, 2
          %v875 = vadd.f32 %v873, %v874
          %v876 = vrot.slane %v875, 1
          %v877 = vadd.f32 %v875, %v876
          %v878 = vmul.f32 %v877, %v868
          %v879 = vadd.f32 %v878, 1e-05
          %v880 = vrsqrt.pop %v879
          %v881 = vmul.f32 %v870, %v880
          %v882 = vld [vmem:[%s13] sm:$0x1]
          %v884 = vlaneseq
          %v885 = vshrl.u32 %v884, 7
          %v886 = vsub.s32 0, %v885
          %v887 = vrot.slane %v882, %v886
          %v889 = vmul.f32 %v881, %v887
          %v890 = vld [vmem:[%s14] sm:$0x1]
          %v892 = vlaneseq
          %v893 = vshrl.u32 %v892, 7
          %v894 = vsub.s32 0, %v893
          %v895 = vrot.slane %v890, %v894
          %v897 = vadd.f32 %v889, %v895
          %v898 = vmax.f32 %v897, 0.0
          %899 = vst [vmem:[#allocation14] sm:$0xff] %v898
        $region103: #{tpu_custom_call.1} parent=75 // pred_fallthru
          _
        // Predicated region
        $region104: #{tpu_custom_call.1} parent=75 // pred_check
          %p900 = pneg %p353
        $region105: #{tpu_custom_call.1} parent=75 // pred_check_branch
          %902 = sbr.rel (%p900) target = $region107
        $region106: #{tpu_custom_call.1} parent=75 // pred_region
          %s904 = ssub.s32 128, 128
          %905 = vsyncadd [#allocation10], %s904
          %s907 = sshll.u32 [#allocation14], 4
          %s908 = int_to_ptr.vmem [resolvable:$true] %s907
          %910 = dma.vmem_to_hbm [thread:$0]  %s908, 128, %s16, [#allocation10]
        $region107: #{tpu_custom_call.1} parent=75 // pred_fallthru
          _
        // Predicated region
        $region108: #{tpu_custom_call.1} parent=75 // pred_check
          %p911 = pneg %p353
        $region109: #{tpu_custom_call.1} parent=75 // pred_check_branch
          %913 = sbr.rel (%p911) target = $region111
        $region110: #{tpu_custom_call.1} parent=75 // pred_region
          %914 = dma.done [#allocation10], 128
        $region111: #{tpu_custom_call.1} parent=75 // pred_fallthru
          _
      $region76: #{tpu_custom_call.1} parent=5 // pred_fallthru
        _
      %p915 = scmp.le.s32.totalorder 2, %s36
      // Predicated region
      $region112: #{tpu_custom_call.1} parent=5 // pred_check
        %p916 = pneg %p915
      $region113: #{tpu_custom_call.1} parent=5 // pred_check_branch
        %918 = sbr.rel (%p916) target = $region115
      $region114: #{tpu_custom_call.1} parent=5 // pred_region
        %s919 = ssub.s32 %s36, 2
      $region115: #{tpu_custom_call.1} parent=5 // pred_fallthru
        _
    $region6: #{tpu_custom_call.1} parent=1 // loop_footer
      %s40 = sadd.s32 1, %s36
    $region7: #{tpu_custom_call.1} parent=1 // loop_footer_branch
      %35 = sbr.rel target = $region3
    $region8: #{tpu_custom_call.1} parent=1 // loop_exit
      _
    %920 = vsyncpa [#allocation9], 1
    %s921 = scalar_lea.sflag [#allocation9], 1
    %922 = vsyncpa %s921, 1
    %923 = vsyncpa [#allocation12], 1
    %924 = vsyncpa [#allocation10], 1
    %s925 = scalar_lea.sflag [#allocation10], 1
    %926 = vsyncpa %s925, 1

</llo_original>
